<compile_context>
chip_gen: v6e
topology: v6e:2x2x1
jax: 0.10.0
libtpu: 0.0.40
codegen_flags: <defaults>
</compile_context>

<pallas_src>
import jax
import jax.numpy as jnp
from jax.experimental import pallas as pl
from jax.experimental.pallas import tpu as pltpu

EPS = 1e-5  # torch.nn.InstanceNorm2d default


def _make_fused_kernel(PC, H, W):
    S = H * W
    inv_S = 1.0 / float(S)

    def kernel(x_ref, edge_ref, w1_ref, g1_ref, be1_ref, w2_ref, g2_ref,
               be2_ref, o_ref):
        xin = x_ref[0]                                    # (PC, S) lane-dense

        # Host-precomputed reflection-edge masks (rows: w==0, w==W-1, h==0, h==H-1).
        em = edge_ref[...]                                # (4, S) float32 0/1
        is_w0 = jnp.broadcast_to(em[0:1, :], (PC, S)) > 0.5
        is_wl = jnp.broadcast_to(em[1:2, :], (PC, S)) > 0.5
        is_h0 = jnp.broadcast_to(em[2:3, :], (PC, S)) > 0.5
        is_hl = jnp.broadcast_to(em[3:4, :], (PC, S)) > 0.5

        def taps(z):
            """(PC,S) -> (9*PC,S): rows k*PC..(k+1)*PC-1 hold tap k = kh*3+kw,
            i.e. z[reflect(h+kh-1), reflect(w+kw-1)] for every output (h, w).
            pltpu.roll follows jnp.roll: out[i] = in[(i - shift) mod S]."""
            z_nx = pltpu.roll(z, S - 1, axis=1)           # z[s+1]
            z_pv = pltpu.roll(z, 1, axis=1)               # z[s-1]
            zw = (jnp.where(is_w0, z_nx, z_pv),           # dw = -1 (reflect at w==0)
                  z,                                       # dw =  0
                  jnp.where(is_wl, z_pv, z_nx))           # dw = +1 (reflect at w==W-1)
            by_dw = []
            for u in zw:
                u_dn = pltpu.roll(u, S - W, axis=1)       # u[s+W]  (row h+1)
                u_up = pltpu.roll(u, W, axis=1)           # u[s-W]  (row h-1)
                by_dw.append((jnp.where(is_h0, u_dn, u_up),   # dh = -1
                              u,                               # dh =  0
                              jnp.where(is_hl, u_up, u_dn)))   # dh = +1
            rows = [by_dw[kw][kh] for kh in range(3) for kw in range(3)]
            return jnp.concatenate(rows, axis=0)          # (9*PC, S), 8-sublane blocks

        def conv_cin(z, w_ref, g_ref, b_ref):
            # One stacked (PC, 9*PC) x (9*PC, S) MXU matmul, f32 accumulate.
            y = jnp.dot(w_ref[...], taps(z), preferred_element_type=jnp.float32)
            # Per-row (= per sample, per channel) instance-norm stats; every
            # column is a valid spatial position so no masking is needed.
            mean = jnp.sum(y, axis=1, keepdims=True) * inv_S
            var = jnp.sum(y * y, axis=1, keepdims=True) * inv_S - mean * mean
            rstd = jax.lax.rsqrt(var + EPS)
            return (y - mean) * (rstd * g_ref[0]) + b_ref[0]

        # Stage 1: conv -> CIN -> ReLU ; Stage 2: conv -> CIN -> + residual.
        y1 = jnp.maximum(conv_cin(xin, w1_ref, g1_ref, be1_ref), 0.0)
        o_ref[0] = conv_cin(y1, w2_ref, g2_ref, be2_ref) + xin

    return kernel


def _pack_weight(w, P):
    """(C,C,3,3) OIHW conv weight -> block-diagonal (P*C, 9*P*C) matrix for the
    stacked-tap matmul.  Column index = k*(P*C) + p*C + ci with k = kh*3+kw;
    the per-sample block diagonal keeps the P packed samples independent."""
    C = w.shape[0]
    wt = jnp.transpose(w, (2, 3, 0, 1)).reshape(9, C, C)      # wt[k, co, ci]
    big = jnp.zeros((P, C, 9, P, C), w.dtype)
    for p in range(P):
        big = big.at[p, :, :, p, :].set(jnp.transpose(wt, (1, 0, 2)))  # (co,k,ci)
    return big.reshape(P * C, 9 * P * C)


def residual_block(x, params):
    """Pallas implementation of ResidualBlock.forward (NCHW in / NCHW out)."""
    w1, b1, g1, be1, w2, b2, g2, be2 = params
    del b1, b2  # conv bias is a per-channel constant: instance norm's mean
                # subtraction cancels it exactly, so it is dropped in-kernel.
    N, C, H, W = x.shape
    S = H * W

    # Pack P batch samples into the sublane axis so f32 vregs run at full
    # 8-sublane occupancy (per-row stats keep instance norm per-sample exact).
    P = 1
    for cand in (8, 4, 2):
        if N % cand == 0 and cand * C <= 8:
            P = cand
            break
    G = N // P
    PC = P * C

    # Lane-dense layouts (metadata reshapes, no extra HBM materialization).
    x_flat = x.reshape(G, PC, S)
    wb1 = _pack_weight(w1, P)
    wb2 = _pack_weight(w2, P)
    g1c, be1c = g1.reshape(G, PC, 1), be1.reshape(G, PC, 1)
    g2c, be2c = g2.reshape(G, PC, 1), be2.reshape(G, PC, 1)

    # Precomputed reflection-edge masks over the flattened spatial axis.
    wi = jnp.arange(S, dtype=jnp.int32) % W
    hi = jnp.arange(S, dtype=jnp.int32) // W
    edge = jnp.stack([wi == 0, wi == W - 1, hi == 0, hi == H - 1]
                     ).astype(jnp.float32)                 # (4, S)

    kernel = _make_fused_kernel(PC, H, W)

    full2d = lambda n: (0, 0)
    per_g = lambda n: (n, 0, 0)

    out_flat = pl.pallas_call(
        kernel,
        out_shape=jax.ShapeDtypeStruct((G, PC, S), jnp.float32),
        grid=(G,),
        in_specs=[
            pl.BlockSpec((1, PC, S), per_g),       # x (stage-1 input + residual)
            pl.BlockSpec((4, S), full2d),          # reflection edge masks
            pl.BlockSpec((PC, 9 * PC), full2d),    # conv1 weight (block-diag, tap-major)
            pl.BlockSpec((1, PC, 1), per_g),       # gamma1 (style id == batch idx)
            pl.BlockSpec((1, PC, 1), per_g),       # beta1
            pl.BlockSpec((PC, 9 * PC), full2d),    # conv2 weight
            pl.BlockSpec((1, PC, 1), per_g),       # gamma2
            pl.BlockSpec((1, PC, 1), per_g),       # beta2
        ],
        out_specs=pl.BlockSpec((1, PC, S), per_g),  # lane-dense, unmasked store
        compiler_params=pltpu.CompilerParams(
            dimension_semantics=("parallel",),      # batch-group axis
        ),
    )(x_flat, edge, wb1, g1c, be1c, wb2, g2c, be2c)

    return out_flat.reshape(N, C, H, W)


# ----------------------- pure-JAX reference (for checking) -----------------------
def _ref_conv_cin(x, w, b, gamma, beta):
    xpad = jnp.pad(x, ((0, 0), (0, 0), (1, 1), (1, 1)), mode="reflect")
    y = jax.lax.conv_general_dilated(
        xpad, w, window_strides=(1, 1), padding="VALID",
        dimension_numbers=("NCHW", "OIHW", "NCHW"),
        precision=jax.lax.Precision.HIGHEST)
    y = y + b[None, :, None, None]
    mean = y.mean(axis=(2, 3), keepdims=True)
    var = ((y - mean) ** 2).mean(axis=(2, 3), keepdims=True)
    yn = (y - mean) / jnp.sqrt(var + EPS)
    return gamma[:, :, None, None] * yn + beta[:, :, None, None]


def residual_block_ref(x, params):
    w1, b1, g1, be1, w2, b2, g2, be2 = params
    h = jnp.maximum(_ref_conv_cin(x, w1, b1, g1, be1), 0.0)
    return _ref_conv_cin(h, w2, b2, g2, be2) + x


if __name__ == "__main__":
    # batch == style_num so the conditional gamma/beta broadcast matches the
    # original module's (style_num, C, 1, 1) * (N, C, H, W) pattern.
    N, C, H, W = 2, 4, 16, 16
    key = jax.random.PRNGKey(0)
    ks = jax.random.split(key, 8)

    bound = 1.0 / (C * 3 * 3) ** 0.5  # torch Conv2d default init scale
    w1 = jax.random.uniform(ks[0], (C, C, 3, 3), jnp.float32, -bound, bound)
    b1 = jax.random.uniform(ks[1], (C,), jnp.float32, -bound, bound)
    w2 = jax.random.uniform(ks[2], (C, C, 3, 3), jnp.float32, -bound, bound)
    b2 = jax.random.uniform(ks[3], (C,), jnp.float32, -bound, bound)
    # ConditionalInstanceNorm2d embedding init: gamma ~ N(1, 0.02), beta = 0.
    g1 = 1.0 + 0.02 * jax.random.normal(ks[4], (N, C), jnp.float32)
    g2 = 1.0 + 0.02 * jax.random.normal(ks[5], (N, C), jnp.float32)
    be1 = jnp.zeros((N, C), jnp.float32)
    be2 = jnp.zeros((N, C), jnp.float32)
    x = jax.random.normal(ks[6], (N, C, H, W), jnp.float32)

    params = (w1, b1, g1, be1, w2, b2, g2, be2)

    out = jax.block_until_ready(residual_block(x, params))
    ref = jax.block_until_ready(residual_block_ref(x, params))

    assert out.shape == (N, C, H, W)
    max_err = float(jnp.max(jnp.abs(out - ref)))
    # Tolerance covers MXU f32 multi-pass rounding differences vs the XLA conv.
    assert jnp.allclose(out, ref, atol=1e-2, rtol=1e-2), max_err

    print("KERNEL_OK")
</pallas_src>

<mosaic_0001>
module attributes {stable_mosaic.version = 11 : i64} {
  func.func @kernel(%arg0: i32, %arg1: memref<1x8x256xf32, #tpu.memory_space<vmem>>, %arg2: memref<4x256xf32, #tpu.memory_space<vmem>>, %arg3: memref<8x72xf32, #tpu.memory_space<vmem>>, %arg4: memref<1x8x1xf32, #tpu.memory_space<vmem>>, %arg5: memref<1x8x1xf32, #tpu.memory_space<vmem>>, %arg6: memref<8x72xf32, #tpu.memory_space<vmem>>, %arg7: memref<1x8x1xf32, #tpu.memory_space<vmem>>, %arg8: memref<1x8x1xf32, #tpu.memory_space<vmem>>, %arg9: memref<1x8x256xf32, #tpu.memory_space<vmem>>) attributes {dimension_semantics = [#tpu.dimension_semantics<parallel>], iteration_bounds = array<i64: 1>, scalar_prefetch = 0 : i64, scratch_operands = 0 : i64, tpu.core_type = #tpu.core_type<tc>, window_params = [{transform_indices = @transform_0, window_bounds = array<i64: 1, 8, 256>}, {pipeline_mode = #tpu.pipeline_mode<synchronous>, transform_indices = @transform_1, window_bounds = array<i64: 4, 256>}, {pipeline_mode = #tpu.pipeline_mode<synchronous>, transform_indices = @transform_2, window_bounds = array<i64: 8, 72>}, {transform_indices = @transform_3, window_bounds = array<i64: 1, 8, 1>}, {transform_indices = @transform_4, window_bounds = array<i64: 1, 8, 1>}, {pipeline_mode = #tpu.pipeline_mode<synchronous>, transform_indices = @transform_5, window_bounds = array<i64: 8, 72>}, {transform_indices = @transform_6, window_bounds = array<i64: 1, 8, 1>}, {transform_indices = @transform_7, window_bounds = array<i64: 1, 8, 1>}, {transform_indices = @transform_8, window_bounds = array<i64: 1, 8, 256>}]} {
    %c0 = arith.constant 0 : index
    %c0_0 = arith.constant 0 : index
    %c0_1 = arith.constant 0 : index
    %0 = vector.load %arg1[%c0, %c0_0, %c0_1] : memref<1x8x256xf32, #tpu.memory_space<vmem>>, vector<1x8x256xf32>
    %1 = vector.shape_cast %0 : vector<1x8x256xf32> to vector<8x256xf32>
    %c0_2 = arith.constant 0 : index
    %c0_3 = arith.constant 0 : index
    %2 = vector.load %arg2[%c0_2, %c0_3] : memref<4x256xf32, #tpu.memory_space<vmem>>, vector<4x256xf32>
    %3 = vector.extract_strided_slice %2 {offsets = [0, 0], sizes = [1, 256], strides = [1, 1]} : vector<4x256xf32> to vector<1x256xf32>
    %4 = vector.shape_cast %3 : vector<1x256xf32> to vector<1x256xf32>
    %5 = vector.broadcast %4 : vector<1x256xf32> to vector<8x256xf32>
    %cst = arith.constant 5.000000e-01 : f32
    %6 = vector.broadcast %cst : f32 to vector<8x256xf32>
    %7 = arith.cmpf ogt, %5, %6 : vector<8x256xf32>
    %8 = vector.extract_strided_slice %2 {offsets = [1, 0], sizes = [1, 256], strides = [1, 1]} : vector<4x256xf32> to vector<1x256xf32>
    %9 = vector.shape_cast %8 : vector<1x256xf32> to vector<1x256xf32>
    %10 = vector.broadcast %9 : vector<1x256xf32> to vector<8x256xf32>
    %cst_4 = arith.constant 5.000000e-01 : f32
    %11 = vector.broadcast %cst_4 : f32 to vector<8x256xf32>
    %12 = arith.cmpf ogt, %10, %11 : vector<8x256xf32>
    %13 = vector.extract_strided_slice %2 {offsets = [2, 0], sizes = [1, 256], strides = [1, 1]} : vector<4x256xf32> to vector<1x256xf32>
    %14 = vector.shape_cast %13 : vector<1x256xf32> to vector<1x256xf32>
    %15 = vector.broadcast %14 : vector<1x256xf32> to vector<8x256xf32>
    %cst_5 = arith.constant 5.000000e-01 : f32
    %16 = vector.broadcast %cst_5 : f32 to vector<8x256xf32>
    %17 = arith.cmpf ogt, %15, %16 : vector<8x256xf32>
    %18 = vector.extract_strided_slice %2 {offsets = [3, 0], sizes = [1, 256], strides = [1, 1]} : vector<4x256xf32> to vector<1x256xf32>
    %19 = vector.shape_cast %18 : vector<1x256xf32> to vector<1x256xf32>
    %20 = vector.broadcast %19 : vector<1x256xf32> to vector<8x256xf32>
    %cst_6 = arith.constant 5.000000e-01 : f32
    %21 = vector.broadcast %cst_6 : f32 to vector<8x256xf32>
    %22 = arith.cmpf ogt, %20, %21 : vector<8x256xf32>
    %c0_7 = arith.constant 0 : index
    %c0_8 = arith.constant 0 : index
    %23 = vector.load %arg3[%c0_7, %c0_8] : memref<8x72xf32, #tpu.memory_space<vmem>>, vector<8x72xf32>
    %c255_i32 = arith.constant 255 : i32
    %24 = tpu.dynamic_rotate %1 by %c255_i32 dim 1 : vector<8x256xf32>, i32 -> vector<8x256xf32>
    %c1_i32 = arith.constant 1 : i32
    %25 = tpu.dynamic_rotate %1 by %c1_i32 dim 1 : vector<8x256xf32>, i32 -> vector<8x256xf32>
    %26 = arith.select %7, %24, %25 : vector<8x256xi1>, vector<8x256xf32>
    %27 = arith.select %12, %25, %24 : vector<8x256xi1>, vector<8x256xf32>
    %c240_i32 = arith.constant 240 : i32
    %28 = tpu.dynamic_rotate %26 by %c240_i32 dim 1 : vector<8x256xf32>, i32 -> vector<8x256xf32>
    %c16_i32 = arith.constant 16 : i32
    %29 = tpu.dynamic_rotate %26 by %c16_i32 dim 1 : vector<8x256xf32>, i32 -> vector<8x256xf32>
    %30 = arith.select %17, %28, %29 : vector<8x256xi1>, vector<8x256xf32>
    %31 = arith.select %22, %29, %28 : vector<8x256xi1>, vector<8x256xf32>
    %c240_i32_9 = arith.constant 240 : i32
    %32 = tpu.dynamic_rotate %1 by %c240_i32_9 dim 1 : vector<8x256xf32>, i32 -> vector<8x256xf32>
    %c16_i32_10 = arith.constant 16 : i32
    %33 = tpu.dynamic_rotate %1 by %c16_i32_10 dim 1 : vector<8x256xf32>, i32 -> vector<8x256xf32>
    %34 = arith.select %17, %32, %33 : vector<8x256xi1>, vector<8x256xf32>
    %35 = arith.select %22, %33, %32 : vector<8x256xi1>, vector<8x256xf32>
    %c240_i32_11 = arith.constant 240 : i32
    %36 = tpu.dynamic_rotate %27 by %c240_i32_11 dim 1 : vector<8x256xf32>, i32 -> vector<8x256xf32>
    %c16_i32_12 = arith.constant 16 : i32
    %37 = tpu.dynamic_rotate %27 by %c16_i32_12 dim 1 : vector<8x256xf32>, i32 -> vector<8x256xf32>
    %38 = arith.select %17, %36, %37 : vector<8x256xi1>, vector<8x256xf32>
    %39 = arith.select %22, %37, %36 : vector<8x256xi1>, vector<8x256xf32>
    %40 = tpu.concatenate %30, %34, %38, %26, %1, %27, %31, %35, %39 in 0 : vector<8x256xf32>, vector<8x256xf32>, vector<8x256xf32>, vector<8x256xf32>, vector<8x256xf32>, vector<8x256xf32>, vector<8x256xf32>, vector<8x256xf32>, vector<8x256xf32> -> vector<72x256xf32>
    %cst_13 = arith.constant dense<0.000000e+00> : vector<8x256xf32>
    %41 = tpu.matmul %23, %40, %cst_13 {dimension_numbers = #tpu.dot_dimension_numbers<[1], [0], [0], [1], [0, 0, 1, 1], [], []>} : vector<8x72xf32>, vector<72x256xf32>, vector<8x256xf32> -> vector<8x256xf32>
    %cst_14 = arith.constant dense<0.000000e+00> : vector<8xf32>
    %42 = vector.multi_reduction <add>, %41, %cst_14 [1] : vector<8x256xf32> to vector<8xf32>
    %43 = vector.shape_cast %42 : vector<8xf32> to vector<8x1xf32>
    %cst_15 = arith.constant 3.906250e-03 : f32
    %44 = vector.broadcast %cst_15 : f32 to vector<8x1xf32>
    %45 = arith.mulf %43, %44 : vector<8x1xf32>
    %46 = arith.mulf %41, %41 : vector<8x256xf32>
    %cst_16 = arith.constant dense<0.000000e+00> : vector<8xf32>
    %47 = vector.multi_reduction <add>, %46, %cst_16 [1] : vector<8x256xf32> to vector<8xf32>
    %48 = vector.shape_cast %47 : vector<8xf32> to vector<8x1xf32>
    %cst_17 = arith.constant 3.906250e-03 : f32
    %49 = vector.broadcast %cst_17 : f32 to vector<8x1xf32>
    %50 = arith.mulf %48, %49 : vector<8x1xf32>
    %51 = arith.mulf %45, %45 : vector<8x1xf32>
    %52 = arith.subf %50, %51 : vector<8x1xf32>
    %cst_18 = arith.constant 9.99999974E-6 : f32
    %53 = vector.broadcast %cst_18 : f32 to vector<8x1xf32>
    %54 = arith.addf %52, %53 : vector<8x1xf32>
    %55 = math.rsqrt %54 : vector<8x1xf32>
    %56 = vector.broadcast %45 : vector<8x1xf32> to vector<8x256xf32>
    %57 = arith.subf %41, %56 : vector<8x256xf32>
    %c0_19 = arith.constant 0 : index
    %c0_20 = arith.constant 0 : index
    %c0_21 = arith.constant 0 : index
    %58 = vector.load %arg4[%c0_19, %c0_20, %c0_21] : memref<1x8x1xf32, #tpu.memory_space<vmem>>, vector<1x8x1xf32>
    %59 = vector.shape_cast %58 : vector<1x8x1xf32> to vector<8x1xf32>
    %60 = arith.mulf %55, %59 : vector<8x1xf32>
    %61 = vector.broadcast %60 : vector<8x1xf32> to vector<8x256xf32>
    %62 = arith.mulf %57, %61 : vector<8x256xf32>
    %c0_22 = arith.constant 0 : index
    %c0_23 = arith.constant 0 : index
    %c0_24 = arith.constant 0 : index
    %63 = vector.load %arg5[%c0_22, %c0_23, %c0_24] : memref<1x8x1xf32, #tpu.memory_space<vmem>>, vector<1x8x1xf32>
    %64 = vector.shape_cast %63 : vector<1x8x1xf32> to vector<8x1xf32>
    %65 = vector.broadcast %64 : vector<8x1xf32> to vector<8x256xf32>
    %66 = arith.addf %62, %65 : vector<8x256xf32>
    %cst_25 = arith.constant 0.000000e+00 : f32
    %67 = vector.broadcast %cst_25 : f32 to vector<8x256xf32>
    %68 = arith.maximumf %66, %67 : vector<8x256xf32>
    %c0_26 = arith.constant 0 : index
    %c0_27 = arith.constant 0 : index
    %69 = vector.load %arg6[%c0_26, %c0_27] : memref<8x72xf32, #tpu.memory_space<vmem>>, vector<8x72xf32>
    %c255_i32_28 = arith.constant 255 : i32
    %70 = tpu.dynamic_rotate %68 by %c255_i32_28 dim 1 : vector<8x256xf32>, i32 -> vector<8x256xf32>
    %c1_i32_29 = arith.constant 1 : i32
    %71 = tpu.dynamic_rotate %68 by %c1_i32_29 dim 1 : vector<8x256xf32>, i32 -> vector<8x256xf32>
    %72 = arith.select %7, %70, %71 : vector<8x256xi1>, vector<8x256xf32>
    %73 = arith.select %12, %71, %70 : vector<8x256xi1>, vector<8x256xf32>
    %c240_i32_30 = arith.constant 240 : i32
    %74 = tpu.dynamic_rotate %72 by %c240_i32_30 dim 1 : vector<8x256xf32>, i32 -> vector<8x256xf32>
    %c16_i32_31 = arith.constant 16 : i32
    %75 = tpu.dynamic_rotate %72 by %c16_i32_31 dim 1 : vector<8x256xf32>, i32 -> vector<8x256xf32>
    %76 = arith.select %17, %74, %75 : vector<8x256xi1>, vector<8x256xf32>
    %77 = arith.select %22, %75, %74 : vector<8x256xi1>, vector<8x256xf32>
    %c240_i32_32 = arith.constant 240 : i32
    %78 = tpu.dynamic_rotate %68 by %c240_i32_32 dim 1 : vector<8x256xf32>, i32 -> vector<8x256xf32>
    %c16_i32_33 = arith.constant 16 : i32
    %79 = tpu.dynamic_rotate %68 by %c16_i32_33 dim 1 : vector<8x256xf32>, i32 -> vector<8x256xf32>
    %80 = arith.select %17, %78, %79 : vector<8x256xi1>, vector<8x256xf32>
    %81 = arith.select %22, %79, %78 : vector<8x256xi1>, vector<8x256xf32>
    %c240_i32_34 = arith.constant 240 : i32
    %82 = tpu.dynamic_rotate %73 by %c240_i32_34 dim 1 : vector<8x256xf32>, i32 -> vector<8x256xf32>
    %c16_i32_35 = arith.constant 16 : i32
    %83 = tpu.dynamic_rotate %73 by %c16_i32_35 dim 1 : vector<8x256xf32>, i32 -> vector<8x256xf32>
    %84 = arith.select %17, %82, %83 : vector<8x256xi1>, vector<8x256xf32>
    %85 = arith.select %22, %83, %82 : vector<8x256xi1>, vector<8x256xf32>
    %86 = tpu.concatenate %76, %80, %84, %72, %68, %73, %77, %81, %85 in 0 : vector<8x256xf32>, vector<8x256xf32>, vector<8x256xf32>, vector<8x256xf32>, vector<8x256xf32>, vector<8x256xf32>, vector<8x256xf32>, vector<8x256xf32>, vector<8x256xf32> -> vector<72x256xf32>
    %cst_36 = arith.constant dense<0.000000e+00> : vector<8x256xf32>
    %87 = tpu.matmul %69, %86, %cst_36 {dimension_numbers = #tpu.dot_dimension_numbers<[1], [0], [0], [1], [0, 0, 1, 1], [], []>} : vector<8x72xf32>, vector<72x256xf32>, vector<8x256xf32> -> vector<8x256xf32>
    %cst_37 = arith.constant dense<0.000000e+00> : vector<8xf32>
    %88 = vector.multi_reduction <add>, %87, %cst_37 [1] : vector<8x256xf32> to vector<8xf32>
    %89 = vector.shape_cast %88 : vector<8xf32> to vector<8x1xf32>
    %cst_38 = arith.constant 3.906250e-03 : f32
    %90 = vector.broadcast %cst_38 : f32 to vector<8x1xf32>
    %91 = arith.mulf %89, %90 : vector<8x1xf32>
    %92 = arith.mulf %87, %87 : vector<8x256xf32>
    %cst_39 = arith.constant dense<0.000000e+00> : vector<8xf32>
    %93 = vector.multi_reduction <add>, %92, %cst_39 [1] : vector<8x256xf32> to vector<8xf32>
    %94 = vector.shape_cast %93 : vector<8xf32> to vector<8x1xf32>
    %cst_40 = arith.constant 3.906250e-03 : f32
    %95 = vector.broadcast %cst_40 : f32 to vector<8x1xf32>
    %96 = arith.mulf %94, %95 : vector<8x1xf32>
    %97 = arith.mulf %91, %91 : vector<8x1xf32>
    %98 = arith.subf %96, %97 : vector<8x1xf32>
    %cst_41 = arith.constant 9.99999974E-6 : f32
    %99 = vector.broadcast %cst_41 : f32 to vector<8x1xf32>
    %100 = arith.addf %98, %99 : vector<8x1xf32>
    %101 = math.rsqrt %100 : vector<8x1xf32>
    %102 = vector.broadcast %91 : vector<8x1xf32> to vector<8x256xf32>
    %103 = arith.subf %87, %102 : vector<8x256xf32>
    %c0_42 = arith.constant 0 : index
    %c0_43 = arith.constant 0 : index
    %c0_44 = arith.constant 0 : index
    %104 = vector.load %arg7[%c0_42, %c0_43, %c0_44] : memref<1x8x1xf32, #tpu.memory_space<vmem>>, vector<1x8x1xf32>
    %105 = vector.shape_cast %104 : vector<1x8x1xf32> to vector<8x1xf32>
    %106 = arith.mulf %101, %105 : vector<8x1xf32>
    %107 = vector.broadcast %106 : vector<8x1xf32> to vector<8x256xf32>
    %108 = arith.mulf %103, %107 : vector<8x256xf32>
    %c0_45 = arith.constant 0 : index
    %c0_46 = arith.constant 0 : index
    %c0_47 = arith.constant 0 : index
    %109 = vector.load %arg8[%c0_45, %c0_46, %c0_47] : memref<1x8x1xf32, #tpu.memory_space<vmem>>, vector<1x8x1xf32>
    %110 = vector.shape_cast %109 : vector<1x8x1xf32> to vector<8x1xf32>
    %111 = vector.broadcast %110 : vector<8x1xf32> to vector<8x256xf32>
    %112 = arith.addf %108, %111 : vector<8x256xf32>
    %113 = arith.addf %112, %1 : vector<8x256xf32>
    %c0_48 = arith.constant 0 : index
    %c0_49 = arith.constant 0 : index
    %c0_50 = arith.constant 0 : index
    %114 = vector.load %arg9[%c0_48, %c0_49, %c0_50] : memref<1x8x256xf32, #tpu.memory_space<vmem>>, vector<1x8x256xf32>
    %115 = vector.shape_cast %114 : vector<1x8x256xf32> to vector<8x256xf32>
    %116 = vector.shape_cast %113 : vector<8x256xf32> to vector<1x8x256xf32>
    tpu.vector_store %arg9[%c0_48, %c0_49, %c0_50], %116 {strides = array<i32>} : memref<1x8x256xf32, #tpu.memory_space<vmem>>, vector<1x8x256xf32>,
    return
  }
  func.func @transform_0(%arg0: i32) -> (i32, i32, i32) {
    %c0_i32 = arith.constant 0 : i32
    %c0_i32_0 = arith.constant 0 : i32
    %c0_i32_1 = arith.constant 0 : i32
    return %arg0, %c0_i32, %c0_i32_0 : i32, i32, i32
  }
  func.func @transform_1(%arg0: i32) -> (i32, i32) {
    %c0_i32 = arith.constant 0 : i32
    %c0_i32_0 = arith.constant 0 : i32
    %c0_i32_1 = arith.constant 0 : i32
    return %c0_i32, %c0_i32_0 : i32, i32
  }
  func.func @transform_2(%arg0: i32) -> (i32, i32) {
    %c0_i32 = arith.constant 0 : i32
    %c0_i32_0 = arith.constant 0 : i32
    %c0_i32_1 = arith.constant 0 : i32
    return %c0_i32, %c0_i32_0 : i32, i32
  }
  func.func @transform_3(%arg0: i32) -> (i32, i32, i32) {
    %c0_i32 = arith.constant 0 : i32
    %c0_i32_0 = arith.constant 0 : i32
    %c0_i32_1 = arith.constant 0 : i32
    return %arg0, %c0_i32, %c0_i32_0 : i32, i32, i32
  }
  func.func @transform_4(%arg0: i32) -> (i32, i32, i32) {
    %c0_i32 = arith.constant 0 : i32
    %c0_i32_0 = arith.constant 0 : i32
    %c0_i32_1 = arith.constant 0 : i32
    return %arg0, %c0_i32, %c0_i32_0 : i32, i32, i32
  }
  func.func @transform_5(%arg0: i32) -> (i32, i32) {
    %c0_i32 = arith.constant 0 : i32
    %c0_i32_0 = arith.constant 0 : i32
    %c0_i32_1 = arith.constant 0 : i32
    return %c0_i32, %c0_i32_0 : i32, i32
  }
  func.func @transform_6(%arg0: i32) -> (i32, i32, i32) {
    %c0_i32 = arith.constant 0 : i32
    %c0_i32_0 = arith.constant 0 : i32
    %c0_i32_1 = arith.constant 0 : i32
    return %arg0, %c0_i32, %c0_i32_0 : i32, i32, i32
  }
  func.func @transform_7(%arg0: i32) -> (i32, i32, i32) {
    %c0_i32 = arith.constant 0 : i32
    %c0_i32_0 = arith.constant 0 : i32
    %c0_i32_1 = arith.constant 0 : i32
    return %arg0, %c0_i32, %c0_i32_0 : i32, i32, i32
  }
  func.func @transform_8(%arg0: i32) -> (i32, i32, i32) {
    %c0_i32 = arith.constant 0 : i32
    %c0_i32_0 = arith.constant 0 : i32
    %c0_i32_1 = arith.constant 0 : i32
    return %arg0, %c0_i32, %c0_i32_0 : i32, i32, i32
  }
}

</mosaic_0001>

<llo_original>
// kernel: tpu_custom_call.1
$region0: #{tpu_custom_call.1}
  #allocation0 [shape = 'u32[]', space=smem, size = 0x4, offset = 0x4, fixed_abs, tag = 'smem constant byte address 0x4 - core index']
  #allocation1 [shape = 'u32[144,128]{1,0:T(1,128)}', space=vmem, size = 0x12000, scoped, tag = 'internal scratch']
  %s0 = inlined_call_operand.vmem [shape: f32[1,8,256], index: 0, kind: input, shape index: {}]
  %s1 = inlined_call_operand.vmem [shape: f32[4,256], index: 1, kind: input, shape index: {}]
  %s2 = inlined_call_operand.vmem [shape: f32[8,72], index: 2, kind: input, shape index: {}]
  %s3 = inlined_call_operand.vmem [shape: f32[1,8,1], index: 3, kind: input, shape index: {}]
  %s4 = inlined_call_operand.vmem [shape: f32[1,8,1], index: 4, kind: input, shape index: {}]
  %s5 = inlined_call_operand.vmem [shape: f32[8,72], index: 5, kind: input, shape index: {}]
  %s6 = inlined_call_operand.vmem [shape: f32[1,8,1], index: 6, kind: input, shape index: {}]
  %s7 = inlined_call_operand.vmem [shape: f32[1,8,1], index: 7, kind: input, shape index: {}]
  %s8 = inlined_call_operand.hbm [shape: f32[1,8,256], index: 8, kind: output, shape index: {}]
  %s9 = sld [smem:[#allocation0]]
  $region42: #{tpu_custom_call.1} parent=0
    _
  %s11 = ssub.s32 1, %s9
  %s12 = scalar_select 0, %s11, %s9
  $region1: #{tpu_custom_call.1} parent=0
    #allocation2 [shape = 'u8[8192]{0}', space=vmem, size = 0x2000, scoped, tag = 'output window, operand 0, single buffered']
    #allocation3 [shape = 's32[1]{0}', space=sflag, size = 0x4, scoped, tag = 'scoped memory for tpu_custom_call.1']
    %13 = vsyncpa [#allocation3], 0
    // Predicated region
    $region2: #{tpu_custom_call.1} parent=1 // pred_check
      _
    $region3: #{tpu_custom_call.1} parent=1 // pred_check_branch
      %15 = sbr.rel (0) target = $region5
    $region4: #{tpu_custom_call.1} parent=1 // pred_region
      _
    $region5: #{tpu_custom_call.1} parent=1 // pred_fallthru
      _
    // Predicated region
    $region6: #{tpu_custom_call.1} parent=1 // pred_check
      _
    $region7: #{tpu_custom_call.1} parent=1 // pred_check_branch
      %17 = sbr.rel (0) target = $region9
    $region8: #{tpu_custom_call.1} parent=1 // pred_region
      _
    $region9: #{tpu_custom_call.1} parent=1 // pred_fallthru
      _
    // Predicated region
    $region10: #{tpu_custom_call.1} parent=1 // pred_check
      _
    $region11: #{tpu_custom_call.1} parent=1 // pred_check_branch
      %19 = sbr.rel (0) target = $region13
    $region12: #{tpu_custom_call.1} parent=1 // pred_region
      _
    $region13: #{tpu_custom_call.1} parent=1 // pred_fallthru
      _
    // Predicated region
    $region14: #{tpu_custom_call.1} parent=1 // pred_check
      _
    $region15: #{tpu_custom_call.1} parent=1 // pred_check_branch
      %21 = sbr.rel (0) target = $region17
    $region16: #{tpu_custom_call.1} parent=1 // pred_region
      _
    $region17: #{tpu_custom_call.1} parent=1 // pred_fallthru
      _
    // Predicated region
    $region18: #{tpu_custom_call.1} parent=1 // pred_check
      _
    $region19: #{tpu_custom_call.1} parent=1 // pred_check_branch
      %23 = sbr.rel (0) target = $region21
    $region20: #{tpu_custom_call.1} parent=1 // pred_region
      _
    $region21: #{tpu_custom_call.1} parent=1 // pred_fallthru
      _
    // Predicated region
    $region22: #{tpu_custom_call.1} parent=1 // pred_check
      _
    $region23: #{tpu_custom_call.1} parent=1 // pred_check_branch
      %25 = sbr.rel (0) target = $region25
    $region24: #{tpu_custom_call.1} parent=1 // pred_region
      _
    $region25: #{tpu_custom_call.1} parent=1 // pred_fallthru
      _
    // Predicated region
    $region26: #{tpu_custom_call.1} parent=1 // pred_check
      _
    $region27: #{tpu_custom_call.1} parent=1 // pred_check_branch
      %27 = sbr.rel (0) target = $region29
    $region28: #{tpu_custom_call.1} parent=1 // pred_region
      _
    $region29: #{tpu_custom_call.1} parent=1 // pred_fallthru
      _
    // Predicated region
    $region30: #{tpu_custom_call.1} parent=1 // pred_check
      _
    $region31: #{tpu_custom_call.1} parent=1 // pred_check_branch
      %29 = sbr.rel (0) target = $region33
    $region32: #{tpu_custom_call.1} parent=1 // pred_region
      _
    $region33: #{tpu_custom_call.1} parent=1 // pred_fallthru
      _
    %v30 = vld [vmem:[%s0] sm:$0xff]
    %v31 = vld [vmem:[%s0 + $0x8] sm:$0xff]
    %v32 = vld [vmem:[%s1] sm:$0xff]
    %v34 = vlaneseq
    %v35 = vshrl.u32 %v34, 7
    %v36 = vsub.s32 0, %v35
    %v37 = vrot.slane %v32, %v36
    %v38 = vlaneseq
    %v39 = vshrl.u32 %v38, 7
    %v40 = vsub.s32 4, %v39
    %v41 = vrot.slane %v32, %v40
    %v44 = vlaneseq
    %v45 = vshrl.u32 %v44, 7
    %v46 = vsub.s32 0, %v45
    %v47 = vrot.slane %v37, %v46
    %v48 = vlaneseq
    %v49 = vshrl.u32 %v48, 7
    %v50 = vsub.s32 0, %v49
    %v51 = vrot.slane %v41, %v50
    %vm52 = vcmp.gt.f32.partialorder %v47, 0.5
    %vm53 = vcmp.gt.f32.partialorder %v51, 0.5
    %v54 = vlaneseq
    %v55 = vshrl.u32 %v54, 7
    %v56 = vsub.s32 1, %v55
    %v57 = vrot.slane %v32, %v56
    %v58 = vlaneseq
    %v59 = vshrl.u32 %v58, 7
    %v60 = vsub.s32 5, %v59
    %v61 = vrot.slane %v32, %v60
    %v64 = vlaneseq
    %v65 = vshrl.u32 %v64, 7
    %v66 = vsub.s32 1, %v65
    %v67 = vrot.slane %v57, %v66
    %v68 = vlaneseq
    %v69 = vshrl.u32 %v68, 7
    %v70 = vsub.s32 1, %v69
    %v71 = vrot.slane %v61, %v70
    %vm72 = vcmp.gt.f32.partialorder %v67, 0.5
    %vm73 = vcmp.gt.f32.partialorder %v71, 0.5
    %v74 = vlaneseq
    %v75 = vshrl.u32 %v74, 7
    %v76 = vsub.s32 2, %v75
    %v77 = vrot.slane %v32, %v76
    %v78 = vlaneseq
    %v79 = vshrl.u32 %v78, 7
    %v80 = vsub.s32 6, %v79
    %v81 = vrot.slane %v32, %v80
    %v84 = vlaneseq
    %v85 = vshrl.u32 %v84, 7
    %v86 = vsub.s32 2, %v85
    %v87 = vrot.slane %v77, %v86
    %v88 = vlaneseq
    %v89 = vshrl.u32 %v88, 7
    %v90 = vsub.s32 2, %v89
    %v91 = vrot.slane %v81, %v90
    %vm92 = vcmp.gt.f32.partialorder %v87, 0.5
    %vm93 = vcmp.gt.f32.partialorder %v91, 0.5
    %v94 = vlaneseq
    %v95 = vshrl.u32 %v94, 7
    %v96 = vsub.s32 3, %v95
    %v97 = vrot.slane %v32, %v96
    %v98 = vlaneseq
    %v99 = vshrl.u32 %v98, 7
    %v100 = vsub.s32 7, %v99
    %v101 = vrot.slane %v32, %v100
    %v104 = vlaneseq
    %v105 = vshrl.u32 %v104, 7
    %v106 = vsub.s32 3, %v105
    %v107 = vrot.slane %v97, %v106
    %v108 = vlaneseq
    %v109 = vshrl.u32 %v108, 7
    %v110 = vsub.s32 3, %v109
    %v111 = vrot.slane %v101, %v110
    %vm112 = vcmp.gt.f32.partialorder %v107, 0.5
    %vm113 = vcmp.gt.f32.partialorder %v111, 0.5
    %v114 = vld [vmem:[%s2] sm:$0xff]
    %115 = vrot.lane.b32.xlu0 %v30, 127
    %v116 = vpop.permute.xlu0 %115
    %117 = vrot.lane.b32.xlu0 %v31, 127
    %v118 = vpop.permute.xlu0 %117
    %v119 = vlaneseq
    %v120 = vand.u32 %v119, 127
    %vm121 = vcmp.lt.s32.totalorder %v120, 127
    %v122 = vsel %vm121, %v116, %v118
    %v123 = vsel %vm121, %v118, %v116
    %124 = vrot.lane.b32.xlu0 %v30, 1
    %v125 = vpop.permute.xlu0 %124
    %126 = vrot.lane.b32.xlu0 %v31, 1
    %v127 = vpop.permute.xlu0 %126
    %vm128 = vcmp.lt.s32.totalorder %v120, 1
    %v129 = vsel %vm128, %v125, %v127
    %v130 = vsel %vm128, %v127, %v125
    %v131 = vsel %vm52, %v122, %v130
    %v132 = vsel %vm53, %v123, %v129
    %v133 = vsel %vm72, %v130, %v122
    %v134 = vsel %vm73, %v129, %v123
    %135 = vrot.lane.b32.xlu0 %v131, 112
    %v136 = vpop.permute.xlu0 %135
    %137 = vrot.lane.b32.xlu0 %v132, 112
    %v138 = vpop.permute.xlu0 %137
    %vm139 = vcmp.lt.s32.totalorder %v120, 112
    %v140 = vsel %vm139, %v136, %v138
    %v141 = vsel %vm139, %v138, %v136
    %142 = vrot.lane.b32.xlu0 %v131, 16
    %v143 = vpop.permute.xlu0 %142
    %144 = vrot.lane.b32.xlu0 %v132, 16
    %v145 = vpop.permute.xlu0 %144
    %vm146 = vcmp.lt.s32.totalorder %v120, 16
    %v147 = vsel %vm146, %v143, %v145
    %v148 = vsel %vm146, %v145, %v143
    %v149 = vsel %vm92, %v140, %v148
    %v150 = vsel %vm93, %v141, %v147
    %v151 = vsel %vm112, %v148, %v140
    %v152 = vsel %vm113, %v147, %v141
    %153 = vrot.lane.b32.xlu0 %v30, 112
    %v154 = vpop.permute.xlu0 %153
    %155 = vrot.lane.b32.xlu0 %v31, 112
    %v156 = vpop.permute.xlu0 %155
    %v157 = vsel %vm139, %v154, %v156
    %v158 = vsel %vm139, %v156, %v154
    %159 = vrot.lane.b32.xlu0 %v30, 16
    %v160 = vpop.permute.xlu0 %159
    %161 = vrot.lane.b32.xlu0 %v31, 16
    %v162 = vpop.permute.xlu0 %161
    %v163 = vsel %vm146, %v160, %v162
    %v164 = vsel %vm146, %v162, %v160
    %v165 = vsel %vm92, %v157, %v164
    %v166 = vsel %vm93, %v158, %v163
    %v167 = vsel %vm112, %v164, %v157
    %v168 = vsel %vm113, %v163, %v158
    %169 = vrot.lane.b32.xlu0 %v133, 112
    %v170 = vpop.permute.xlu0 %169
    %171 = vrot.lane.b32.xlu0 %v134, 112
    %v172 = vpop.permute.xlu0 %171
    %v173 = vsel %vm139, %v170, %v172
    %v174 = vsel %vm139, %v172, %v170
    %175 = vrot.lane.b32.xlu0 %v133, 16
    %v176 = vpop.permute.xlu0 %175
    %177 = vrot.lane.b32.xlu0 %v134, 16
    %v178 = vpop.permute.xlu0 %177
    %v179 = vsel %vm146, %v176, %v178
    %v180 = vsel %vm146, %v178, %v176
    %v181 = vsel %vm92, %v173, %v180
    %v182 = vsel %vm93, %v174, %v179
    %v183 = vsel %vm112, %v180, %v173
    %v184 = vsel %vm113, %v179, %v174
    %vm185 = vcmask 588800
    %v187 = vsel %vm185, %v114, 0
    %189 = vmatprep.subr.mxu0 0.0
    %190 = vmatpush1.msra.mxu0 0.0
    %191 = vmatprep.subr.mxu0 0.0
    %192 = vmatpush1.msra.mxu0 0.0
    %193 = vmatprep.subr.mxu0 0.0
    %194 = vmatpush1.msra.mxu0 0.0
    %195 = vmatprep.subr.mxu0 0.0
    %196 = vmatpush1.msra.mxu0 0.0
    %197 = vmatprep.subr.mxu0 0.0
    %198 = vmatpush1.msra.mxu0 0.0
    %199 = vmatprep.subr.mxu0 0.0
    %200 = vmatpush1.msra.mxu0 0.0
    %201 = vmatprep.subr.mxu0 0.0
    %202 = vmatpush1.msra.mxu0 0.0
    %203 = vmatprep.subr.mxu0 %v184
    %204 = vmatpush1.msra.mxu0 %v183
    %205 = vmatprep.subr.mxu0 %v168
    %206 = vmatpush1.msra.mxu0 %v167
    %207 = vmatprep.subr.mxu0 %v152
    %208 = vmatpush1.msra.mxu0 %v151
    %209 = vmatprep.subr.mxu0 %v134
    %210 = vmatpush1.msra.mxu0 %v133
    %211 = vmatprep.subr.mxu0 %v31
    %212 = vmatpush1.msra.mxu0 %v30
    %213 = vmatprep.subr.mxu0 %v132
    %214 = vmatpush1.msra.mxu0 %v131
    %215 = vmatprep.subr.mxu0 %v182
    %216 = vmatpush1.msra.mxu0 %v181
    %217 = vmatprep.subr.mxu0 %v166
    %218 = vmatpush1.msra.mxu0 %v165
    %219 = vmatprep.subr.mxu0 %v150
    %220 = vmatpush1.msra.mxu0 %v149
    %221 = vmatprep.subr.mxu0 0.0
    %222 = vmatpush2.msra.mxu0 0.0
    %223 = vmatprep.subr.mxu0 0.0
    %224 = vmatpush2.msra.mxu0 0.0
    %225 = vmatprep.subr.mxu0 0.0
    %226 = vmatpush2.msra.mxu0 0.0
    %227 = vmatprep.subr.mxu0 0.0
    %228 = vmatpush2.msra.mxu0 0.0
    %229 = vmatprep.subr.mxu0 0.0
    %230 = vmatpush2.msra.mxu0 0.0
    %231 = vmatprep.subr.mxu0 0.0
    %232 = vmatpush2.msra.mxu0 0.0
    %233 = vmatprep.subr.mxu0 0.0
    %234 = vmatpush2.msra.mxu0 0.0
    %235 = vmatprep.subr.mxu0 0.0
    %236 = vmatpush2.msra.mxu0 0.0
    %237 = vmatprep.subr.mxu0 0.0
    %238 = vmatpush2.msra.mxu0 0.0
    %239 = vmatprep.subr.mxu0 0.0
    %240 = vmatpush2.msra.mxu0 0.0
    %241 = vmatprep.subr.mxu0 0.0
    %242 = vmatpush2.msra.mxu0 0.0
    %243 = vmatprep.subr.mxu0 0.0
    %244 = vmatpush2.msra.mxu0 0.0
    %245 = vmatprep.subr.mxu0 0.0
    %246 = vmatpush2.msra.mxu0 0.0
    %247 = vmatprep.subr.mxu0 0.0
    %248 = vmatpush2.msra.mxu0 0.0
    %249 = vmatprep.subr.mxu0 0.0
    %250 = vmatpush2.msra.mxu0 0.0
    %251 = vmatprep.subr.mxu0 0.0
    %252 = vmatpush2.msra.mxu0 0.0
    %253 = vmatprep.mubr.f32.mxu0 0.0
    %254 = vmatmul.mubr.f32.gmra.mxu0 %v187
    %v255 = vpop.f32.mrf.mxu0
    %v256 = vadd.f32 0.0, %v255
    %v257 = vpop.f32.mrf.mxu0
    %v258 = vadd.f32 0.0, %v257
    %259 = vdwg.mxu0
    %v260 = vadd.f32 %v256, %v258
    %261 = vadd.xlane.f32.xlu0 %v260
    %v262 = vpop.xlane.xlu0 %261
    %v263 = vmul.f32 %v262, 0.00390625
    %v264 = vmul.f32 %v256, %v256
    %v265 = vmul.f32 %v258, %v258
    %v266 = vadd.f32 %v264, %v265
    %267 = vadd.xlane.f32.xlu0 %v266
    %v268 = vpop.xlane.xlu0 %267
    %v269 = vmul.f32 %v268, 0.00390625
    %v270 = vmul.f32 %v263, %v263
    %v271 = vsub.f32 %v269, %v270
    %v272 = vadd.f32 %v271, 1e-05
    %v273 = vrsqrt.pop %v272
    %v274 = vsub.f32 %v256, %v263
    %v275 = vsub.f32 %v258, %v263
    %v276 = vld [vmem:[%s3] sm:$0xff]
    %v277 = vmul.f32 %v273, %v276
    %279 = vset.pattern.permute.xlu0 0
    %280 = vperm.xlu0 %279, %v277
    %v281 = vpop.permute.xlu0 %280
    %v283 = vmul.f32 %v274, %v281
    %v284 = vmul.f32 %v275, %v281
    %v285 = vld [vmem:[%s4] sm:$0xff]
    %287 = vset.pattern.permute.xlu0 0
    %288 = vperm.xlu0 %287, %v285
    %v289 = vpop.permute.xlu0 %288
    %v291 = vadd.f32 %v283, %v289
    %v292 = vadd.f32 %v284, %v289
    %v293 = vmax.f32 %v291, 0.0
    %v294 = vmax.f32 %v292, 0.0
    %v295 = vld [vmem:[%s5] sm:$0xff]
    %296 = vrot.lane.b32.xlu0 %v293, 127
    %v297 = vpop.permute.xlu0 %296
    %298 = vrot.lane.b32.xlu0 %v294, 127
    %v299 = vpop.permute.xlu0 %298
    %v300 = vsel %vm121, %v297, %v299
    %v301 = vsel %vm121, %v299, %v297
    %302 = vrot.lane.b32.xlu0 %v293, 1
    %v303 = vpop.permute.xlu0 %302
    %304 = vrot.lane.b32.xlu0 %v294, 1
    %v305 = vpop.permute.xlu0 %304
    %v306 = vsel %vm128, %v303, %v305
    %v307 = vsel %vm128, %v305, %v303
    %v308 = vsel %vm52, %v300, %v307
    %v309 = vsel %vm53, %v301, %v306
    %v310 = vsel %vm72, %v307, %v300
    %v311 = vsel %vm73, %v306, %v301
    %312 = vrot.lane.b32.xlu0 %v308, 112
    %v313 = vpop.permute.xlu0 %312
    %314 = vrot.lane.b32.xlu0 %v309, 112
    %v315 = vpop.permute.xlu0 %314
    %v316 = vsel %vm139, %v313, %v315
    %v317 = vsel %vm139, %v315, %v313
    %318 = vrot.lane.b32.xlu0 %v308, 16
    %v319 = vpop.permute.xlu0 %318
    %320 = vrot.lane.b32.xlu0 %v309, 16
    %v321 = vpop.permute.xlu0 %320
    %v322 = vsel %vm146, %v319, %v321
    %v323 = vsel %vm146, %v321, %v319
    %v324 = vsel %vm92, %v316, %v323
    %v325 = vsel %vm93, %v317, %v322
    %v326 = vsel %vm112, %v323, %v316
    %v327 = vsel %vm113, %v322, %v317
    %328 = vrot.lane.b32.xlu0 %v293, 112
    %v329 = vpop.permute.xlu0 %328
    %330 = vrot.lane.b32.xlu0 %v294, 112
    %v331 = vpop.permute.xlu0 %330
    %v332 = vsel %vm139, %v329, %v331
    %v333 = vsel %vm139, %v331, %v329
    %334 = vrot.lane.b32.xlu0 %v293, 16
    %v335 = vpop.permute.xlu0 %334
    %336 = vrot.lane.b32.xlu0 %v294, 16
    %v337 = vpop.permute.xlu0 %336
    %v338 = vsel %vm146, %v335, %v337
    %v339 = vsel %vm146, %v337, %v335
    %v340 = vsel %vm92, %v332, %v339
    %v341 = vsel %vm93, %v333, %v338
    %v342 = vsel %vm112, %v339, %v332
    %v343 = vsel %vm113, %v338, %v333
    %344 = vrot.lane.b32.xlu0 %v310, 112
    %v345 = vpop.permute.xlu0 %344
    %346 = vrot.lane.b32.xlu0 %v311, 112
    %v347 = vpop.permute.xlu0 %346
    %v348 = vsel %vm139, %v345, %v347
    %v349 = vsel %vm139, %v347, %v345
    %350 = vrot.lane.b32.xlu0 %v310, 16
    %v351 = vpop.permute.xlu0 %350
    %352 = vrot.lane.b32.xlu0 %v311, 16
    %v353 = vpop.permute.xlu0 %352
    %v354 = vsel %vm146, %v351, %v353
    %v355 = vsel %vm146, %v353, %v351
    %v356 = vsel %vm92, %v348, %v355
    %v357 = vsel %vm93, %v349, %v354
    %v358 = vsel %vm112, %v355, %v348
    %v359 = vsel %vm113, %v354, %v349
    %v361 = vsel %vm185, %v295, 0
    %363 = vmatprep.subr.mxu0 0.0
    %364 = vmatpush1.msra.mxu0 0.0
    %365 = vmatprep.subr.mxu0 0.0
    %366 = vmatpush1.msra.mxu0 0.0
    %367 = vmatprep.subr.mxu0 0.0
    %368 = vmatpush1.msra.mxu0 0.0
    %369 = vmatprep.subr.mxu0 0.0
    %370 = vmatpush1.msra.mxu0 0.0
    %371 = vmatprep.subr.mxu0 0.0
    %372 = vmatpush1.msra.mxu0 0.0
    %373 = vmatprep.subr.mxu0 0.0
    %374 = vmatpush1.msra.mxu0 0.0
    %375 = vmatprep.subr.mxu0 0.0
    %376 = vmatpush1.msra.mxu0 0.0
    %377 = vmatprep.subr.mxu0 %v359
    %378 = vmatpush1.msra.mxu0 %v358
    %379 = vmatprep.subr.mxu0 %v343
    %380 = vmatpush1.msra.mxu0 %v342
    %381 = vmatprep.subr.mxu0 %v327
    %382 = vmatpush1.msra.mxu0 %v326
    %383 = vmatprep.subr.mxu0 %v311
    %384 = vmatpush1.msra.mxu0 %v310
    %385 = vmatprep.subr.mxu0 %v294
    %386 = vmatpush1.msra.mxu0 %v293
    %387 = vmatprep.subr.mxu0 %v309
    %388 = vmatpush1.msra.mxu0 %v308
    %389 = vmatprep.subr.mxu0 %v357
    %390 = vmatpush1.msra.mxu0 %v356
    %391 = vmatprep.subr.mxu0 %v341
    %392 = vmatpush1.msra.mxu0 %v340
    %393 = vmatprep.subr.mxu0 %v325
    %394 = vmatpush1.msra.mxu0 %v324
    %395 = vmatprep.subr.mxu0 0.0
    %396 = vmatpush2.msra.mxu0 0.0
    %397 = vmatprep.subr.mxu0 0.0
    %398 = vmatpush2.msra.mxu0 0.0
    %399 = vmatprep.subr.mxu0 0.0
    %400 = vmatpush2.msra.mxu0 0.0
    %401 = vmatprep.subr.mxu0 0.0
    %402 = vmatpush2.msra.mxu0 0.0
    %403 = vmatprep.subr.mxu0 0.0
    %404 = vmatpush2.msra.mxu0 0.0
    %405 = vmatprep.subr.mxu0 0.0
    %406 = vmatpush2.msra.mxu0 0.0
    %407 = vmatprep.subr.mxu0 0.0
    %408 = vmatpush2.msra.mxu0 0.0
    %409 = vmatprep.subr.mxu0 0.0
    %410 = vmatpush2.msra.mxu0 0.0
    %411 = vmatprep.subr.mxu0 0.0
    %412 = vmatpush2.msra.mxu0 0.0
    %413 = vmatprep.subr.mxu0 0.0
    %414 = vmatpush2.msra.mxu0 0.0
    %415 = vmatprep.subr.mxu0 0.0
    %416 = vmatpush2.msra.mxu0 0.0
    %417 = vmatprep.subr.mxu0 0.0
    %418 = vmatpush2.msra.mxu0 0.0
    %419 = vmatprep.subr.mxu0 0.0
    %420 = vmatpush2.msra.mxu0 0.0
    %421 = vmatprep.subr.mxu0 0.0
    %422 = vmatpush2.msra.mxu0 0.0
    %423 = vmatprep.subr.mxu0 0.0
    %424 = vmatpush2.msra.mxu0 0.0
    %425 = vmatprep.subr.mxu0 0.0
    %426 = vmatpush2.msra.mxu0 0.0
    %427 = vmatprep.mubr.f32.mxu0 0.0
    %428 = vmatmul.mubr.f32.gmra.mxu0 %v361
    %v429 = vpop.f32.mrf.mxu0
    %v430 = vadd.f32 0.0, %v429
    %v431 = vpop.f32.mrf.mxu0
    %v432 = vadd.f32 0.0, %v431
    %433 = vdwg.mxu0
    %v434 = vadd.f32 %v430, %v432
    %435 = vadd.xlane.f32.xlu0 %v434
    %v436 = vpop.xlane.xlu0 %435
    %v437 = vmul.f32 %v436, 0.00390625
    %v438 = vmul.f32 %v430, %v430
    %v439 = vmul.f32 %v432, %v432
    %v440 = vadd.f32 %v438, %v439
    %441 = vadd.xlane.f32.xlu0 %v440
    %v442 = vpop.xlane.xlu0 %441
    %v443 = vmul.f32 %v442, 0.00390625
    %v444 = vmul.f32 %v437, %v437
    %v445 = vsub.f32 %v443, %v444
    %v446 = vadd.f32 %v445, 1e-05
    %v447 = vrsqrt.pop %v446
    %v448 = vsub.f32 %v430, %v437
    %v449 = vsub.f32 %v432, %v437
    %v450 = vld [vmem:[%s6] sm:$0xff]
    %v451 = vmul.f32 %v447, %v450
    %453 = vset.pattern.permute.xlu0 0
    %454 = vperm.xlu0 %453, %v451
    %v455 = vpop.permute.xlu0 %454
    %v457 = vmul.f32 %v448, %v455
    %v458 = vmul.f32 %v449, %v455
    %v459 = vld [vmem:[%s7] sm:$0xff]
    %461 = vset.pattern.permute.xlu0 0
    %462 = vperm.xlu0 %461, %v459
    %v463 = vpop.permute.xlu0 %462
    %v465 = vadd.f32 %v457, %v463
    %v466 = vadd.f32 %v458, %v463
    %v467 = vadd.f32 %v465, %v30
    %v468 = vadd.f32 %v466, %v31
    %469 = vst [vmem:[#allocation2] sm:$0xff] %v467
    %470 = vst [vmem:[#allocation2 + $0x8] sm:$0xff] %v468
    // Predicated region
    $region34: #{tpu_custom_call.1} parent=1 // pred_check
      _
    $region35: #{tpu_custom_call.1} parent=1 // pred_check_branch
      %472 = sbr.rel (0) target = $region37
    $region36: #{tpu_custom_call.1} parent=1 // pred_region
      %s474 = ssub.s32 256, 256
      %475 = vsyncadd [#allocation3], %s474
      %s477 = sshll.u32 [#allocation2], 4
      %s478 = int_to_ptr.vmem [resolvable:$true] %s477
      %480 = dma.vmem_to_hbm [thread:$0]  %s478, 256, %s8, [#allocation3]
    $region37: #{tpu_custom_call.1} parent=1 // pred_fallthru
      _
    // Predicated region
    $region38: #{tpu_custom_call.1} parent=1 // pred_check
      _
    $region39: #{tpu_custom_call.1} parent=1 // pred_check_branch
      %482 = sbr.rel (0) target = $region41
    $region40: #{tpu_custom_call.1} parent=1 // pred_region
      %483 = dma.done [#allocation3], 256
    $region41: #{tpu_custom_call.1} parent=1 // pred_fallthru
      _
    %484 = vsyncpa [#allocation3], 1

</llo_original>
